<compile_context>
chip_gen: v7x
topology: tpu7x:2x2x1
jax: 0.10.0
libtpu: 0.0.40
codegen_flags: <defaults>
</compile_context>

<pallas_src>
import functools
import math

import jax
import jax.numpy as jnp
from jax import lax
from jax.experimental import pallas as pl
from jax.experimental.pallas import tpu as pltpu

LANES = 128
STRIP_ROWS = 512   # rows per in-kernel accumulation strip (caps live VMEM temps)


def _round_up(x, m):
    return (x + m - 1) // m * m


def _device_tiling():
    """Generation-dependent (max block rows, TensorCores-per-chip)."""
    try:
        kind = jax.devices()[0].device_kind.lower()
    except Exception:
        kind = ""
    if "v7" in kind:
        return 8192, 2          # 2 TCs/chip, 64 MiB VMEM per TC
    if "v6" in kind:
        return 8192, 1          # 1 TC, 128 MiB VMEM
    if "v5" in kind:
        return 4096, 1          # keep inside v5e's smaller scoped-VMEM budget
    return 2048, 1              # conservative fallback (older / unknown gens)


def _focal_terms(x, t, gamma, alpha):
    """Element-wise focal loss terms in f32 (numerically stable BCE-with-logits)."""
    bce = jnp.maximum(x, 0.0) - x * t + jnp.log1p(jnp.exp(-jnp.abs(x)))
    pt = jnp.exp(-bce)
    q = 1.0 - pt
    mod = q * q if gamma == 2.0 else q ** gamma   # avoid float pow for default gamma
    return alpha * mod * bce


def _focal_kernel(x_ref, t_ref, o_ref, *, rows_total, block_rows, strip_rows,
                  blocks_per_core, gamma, alpha):
    c = pl.program_id(0)              # "parallel" axis (per-TensorCore partial sums)
    s = pl.program_id(1)              # sequential reduction axis

    @pl.when(s == 0)
    def _():
        o_ref[...] = jnp.zeros_like(o_ref)

    blk = c * blocks_per_core + s     # logical (unclamped) block id
    nstrips = block_rows // strip_rows

    def load_strip(i):
        r0 = pl.multiple_of(i * strip_rows, strip_rows)
        x = x_ref[pl.ds(r0, strip_rows), :].astype(jnp.float32)
        t = t_ref[pl.ds(r0, strip_rows), :].astype(jnp.float32)
        return r0, x, t

    # Fast path: every row of this block lies inside the array -> no mask work.
    is_full = (blk + 1) * block_rows <= rows_total

    @pl.when(is_full)
    def _fast():
        def body(i, acc):
            _, x, t = load_strip(i)
            f = _focal_terms(x, t, gamma, alpha)
            return acc + f.reshape(strip_rows // 8, 8, LANES).sum(axis=0)
        acc = lax.fori_loop(0, nstrips, body,
                            jnp.zeros((8, LANES), jnp.float32))
        o_ref[...] += acc

    # Slow path: boundary block or clamped duplicate -> mask by global row id.
    @pl.when(jnp.logical_not(is_full))
    def _slow():
        base = blk * block_rows
        def body(i, acc):
            r0, x, t = load_strip(i)
            row = base + r0 + lax.broadcasted_iota(
                jnp.int32, (strip_rows, LANES), 0)
            valid = row < rows_total
            # Sanitize overhang before the transcendentals (undefined data may
            # be NaN/Inf), then zero its contribution.
            x = jnp.where(valid, x, 0.0)
            t = jnp.where(valid, t, 0.0)
            f = jnp.where(valid, _focal_terms(x, t, gamma, alpha), 0.0)
            return acc + f.reshape(strip_rows // 8, 8, LANES).sum(axis=0)
        acc = lax.fori_loop(0, nstrips, body,
                            jnp.zeros((8, LANES), jnp.float32))
        o_ref[...] += acc


def binary_focal_loss(logits, targets, *, gamma=2.0, alpha=0.25):
    """Mean binary focal loss over all elements (use_logits=True).

    Inputs may be any float dtype; bf16 logits/targets stream at native width
    and are cast to f32 in-VMEM inside the kernel (targets in {0,1} are exact
    in bf16, halving the targets HBM stream).
    """
    assert logits.shape == targets.shape
    n_elem = logits.size
    x_flat = logits.reshape(-1)
    t_flat = targets.reshape(-1)

    # Ragged (<128-element) tail handled in plain JAX; the kernel only ever
    # sees a lane-aligned (rows, 128) view -> no full-array jnp.pad copies.
    n_main = n_elem - (n_elem % LANES)
    rows = n_main // LANES

    tail_sum = jnp.float32(0.0)
    if n_main < n_elem:
        xt = x_flat[n_main:].astype(jnp.float32)
        tt = t_flat[n_main:].astype(jnp.float32)
        tail_sum = jnp.sum(_focal_terms(xt, tt, gamma, alpha))

    if rows == 0:   # fewer than 128 elements total
        return tail_sum / jnp.float32(n_elem)

    x2 = x_flat[:n_main].reshape(rows, LANES)
    t2 = t_flat[:n_main].reshape(rows, LANES)

    max_rows, max_cores = _device_tiling()
    block_rows = max_rows if rows >= max_rows else _round_up(rows, 8)
    strip_rows = math.gcd(block_rows, STRIP_ROWS)
    total_blocks = -(-rows // block_rows)
    ncores = max_cores if total_blocks >= max_cores else 1
    blocks_per_core = -(-total_blocks // ncores)

    def in_map(c, s):
        # Clamp so the DMA never addresses past the last block; the kernel's
        # row mask (built from the unclamped id) zeroes any duplicated block.
        return (jnp.minimum(c * blocks_per_core + s, total_blocks - 1), 0)

    kernel = functools.partial(
        _focal_kernel, rows_total=rows, block_rows=block_rows,
        strip_rows=strip_rows, blocks_per_core=blocks_per_core,
        gamma=gamma, alpha=alpha)

    tile_spec = pl.BlockSpec((block_rows, LANES), in_map)

    # Double-buffered input tiles + headroom (output block, internal scratch).
    in_bytes = block_rows * LANES * (x2.dtype.itemsize + t2.dtype.itemsize)
    vmem_limit = int(2 * in_bytes + (8 << 20))

    partial_sums = pl.pallas_call(
        kernel,
        out_shape=jax.ShapeDtypeStruct((ncores * 8, LANES), jnp.float32),
        grid_spec=pltpu.PrefetchScalarGridSpec(
            num_scalar_prefetch=0,
            grid=(ncores, blocks_per_core),
            in_specs=[tile_spec, tile_spec],
            out_specs=pl.BlockSpec((8, LANES), lambda c, s: (c, 0)),
        ),
        compiler_params=pltpu.CompilerParams(
            dimension_semantics=("parallel", "arbitrary"),
            vmem_limit_bytes=vmem_limit),
    )(x2, t2)

    return (jnp.sum(partial_sums) + tail_sum) / jnp.float32(n_elem)


def _reference(logits, targets, gamma=2.0, alpha=0.25):
    x = logits.astype(jnp.float32).reshape(-1)
    t = targets.astype(jnp.float32).reshape(-1)
    bce = jnp.maximum(x, 0.0) - x * t + jnp.log1p(jnp.exp(-jnp.abs(x)))
    pt = jnp.exp(-bce)
    return jnp.mean(alpha * (1.0 - pt) ** gamma * bce)


if __name__ == "__main__":
    key = jax.random.PRNGKey(0)

    # Primary: NCHW segmentation-style inputs.
    k1, k2 = jax.random.split(key)
    shape = (2, 4, 16, 16)
    logits = jax.random.normal(k1, shape, dtype=jnp.float32)
    targets = (jax.random.uniform(k2, shape) > 0.5).astype(jnp.float32)

    loss = binary_focal_loss(logits, targets)
    jax.block_until_ready(loss)
    ref = _reference(logits, targets)
    assert jnp.allclose(loss, ref, rtol=1e-5, atol=1e-6), (loss, ref)

    # Unaligned element count -> exercises the ragged-tail + row-mask slow path.
    k3, k4 = jax.random.split(k1)
    shape2 = (2, 3, 11, 13)
    logits2 = jax.random.normal(k3, shape2, dtype=jnp.float32)
    targets2 = (jax.random.uniform(k4, shape2) > 0.5).astype(jnp.float32)
    loss2 = binary_focal_loss(logits2, targets2)
    jax.block_until_ready(loss2)
    ref2 = _reference(logits2, targets2)
    assert jnp.allclose(loss2, ref2, rtol=1e-5, atol=1e-6), (loss2, ref2)

    # Larger input -> multi-strip blocks; exercises fast/slow path split and
    # (on multi-block configs) the clamped-duplicate handling.
    k5, k6 = jax.random.split(k2)
    shape3 = (1, 1, 640, 1024)
    logits3 = jax.random.normal(k5, shape3, dtype=jnp.float32)
    targets3 = (jax.random.uniform(k6, shape3) > 0.5).astype(jnp.float32)
    loss3 = binary_focal_loss(logits3, targets3)
    jax.block_until_ready(loss3)
    ref3 = _reference(logits3, targets3)
    assert jnp.allclose(loss3, ref3, rtol=1e-4, atol=1e-6), (loss3, ref3)

    print("KERNEL_OK")
</pallas_src>

<mosaic_0001>
module attributes {stable_mosaic.version = 11 : i64} {
  func.func @_focal_kernel(%arg0: i32, %arg1: i32, %arg2: memref<16x128xf32, #tpu.memory_space<vmem>>, %arg3: memref<16x128xf32, #tpu.memory_space<vmem>>, %arg4: memref<8x128xf32, #tpu.memory_space<vmem>>) attributes {dimension_semantics = [#tpu.dimension_semantics<parallel>, #tpu.dimension_semantics<arbitrary>], iteration_bounds = array<i64: 1, 1>, scalar_prefetch = 0 : i64, scratch_operands = 0 : i64, tpu.core_type = #tpu.core_type<tc>, window_params = [{transform_indices = @transform_0, window_bounds = array<i64: 16, 128>}, {transform_indices = @transform_1, window_bounds = array<i64: 16, 128>}, {transform_indices = @transform_2, window_bounds = array<i64: 8, 128>}]} {
    %c0_i32 = arith.constant 0 : i32
    %0 = arith.cmpi eq, %arg1, %c0_i32 : i32
    %1 = arith.extui %0 : i1 to i32
    %c0_i32_0 = arith.constant 0 : i32
    %2 = arith.cmpi ne, %1, %c0_i32_0 : i32
    scf.if %2 {
      %cst = arith.constant 0.000000e+00 : f32
      %13 = vector.broadcast %cst : f32 to vector<8x128xf32>
      %c0 = arith.constant 0 : index
      %c0_5 = arith.constant 0 : index
      %14 = vector.load %arg4[%c0, %c0_5] : memref<8x128xf32, #tpu.memory_space<vmem>>, vector<8x128xf32>
      tpu.vector_store %arg4[%c0, %c0_5], %13 {strides = array<i32>} : memref<8x128xf32, #tpu.memory_space<vmem>>, vector<8x128xf32>,
    } else {
    }
    %c1_i32 = arith.constant 1 : i32
    %3 = arith.muli %arg0, %c1_i32 : i32
    %4 = arith.addi %3, %arg1 : i32
    %c1_i32_1 = arith.constant 1 : i32
    %5 = arith.addi %4, %c1_i32_1 : i32
    %c16_i32 = arith.constant 16 : i32
    %6 = arith.muli %5, %c16_i32 : i32
    %c16_i32_2 = arith.constant 16 : i32
    %7 = arith.cmpi sle, %6, %c16_i32_2 : i32
    %8 = arith.extui %7 : i1 to i32
    %c0_i32_3 = arith.constant 0 : i32
    %9 = arith.cmpi ne, %8, %c0_i32_3 : i32
    scf.if %9 {
      %cst = arith.constant 0.000000e+00 : f32
      %13 = vector.broadcast %cst : f32 to vector<8x128xf32>
      %c0_i32_5 = arith.constant 0 : i32
      %c16_i32_6 = arith.constant 16 : i32
      %14 = arith.muli %c0_i32_5, %c16_i32_6 : i32
      %15 = tpu.assume_multiple %14, 16 : i32
      %16 = arith.index_cast %15 : i32 to index
      %c0 = arith.constant 0 : index
      %17 = vector.load %arg2[%16, %c0] : memref<16x128xf32, #tpu.memory_space<vmem>>, vector<16x128xf32>
      %18 = arith.index_cast %15 : i32 to index
      %c0_7 = arith.constant 0 : index
      %19 = vector.load %arg3[%18, %c0_7] : memref<16x128xf32, #tpu.memory_space<vmem>>, vector<16x128xf32>
      %cst_8 = arith.constant 0.000000e+00 : f32
      %20 = vector.broadcast %cst_8 : f32 to vector<16x128xf32>
      %21 = arith.maximumf %17, %20 : vector<16x128xf32>
      %22 = arith.mulf %17, %19 : vector<16x128xf32>
      %23 = arith.subf %21, %22 : vector<16x128xf32>
      %24 = math.absf %17 : vector<16x128xf32>
      %cst_9 = arith.constant 0.000000e+00 : f32
      %25 = vector.broadcast %cst_9 : f32 to vector<16x128xf32>
      %26 = arith.subf %25, %24 : vector<16x128xf32>
      %27 = math.exp %26 : vector<16x128xf32>
      %28 = math.log1p %27 : vector<16x128xf32>
      %29 = arith.addf %23, %28 : vector<16x128xf32>
      %cst_10 = arith.constant 0.000000e+00 : f32
      %30 = vector.broadcast %cst_10 : f32 to vector<16x128xf32>
      %31 = arith.subf %30, %29 : vector<16x128xf32>
      %32 = math.exp %31 : vector<16x128xf32>
      %cst_11 = arith.constant 1.000000e+00 : f32
      %33 = vector.broadcast %cst_11 : f32 to vector<16x128xf32>
      %34 = arith.subf %33, %32 : vector<16x128xf32>
      %35 = arith.mulf %34, %34 : vector<16x128xf32>
      %cst_12 = arith.constant 2.500000e-01 : f32
      %36 = vector.broadcast %cst_12 : f32 to vector<16x128xf32>
      %37 = arith.mulf %36, %35 : vector<16x128xf32>
      %38 = arith.mulf %37, %29 : vector<16x128xf32>
      %39 = vector.shape_cast %38 : vector<16x128xf32> to vector<2x8x128xf32>
      %cst_13 = arith.constant dense<0.000000e+00> : vector<8x128xf32>
      %40 = vector.multi_reduction <add>, %39, %cst_13 [0] : vector<2x8x128xf32> to vector<8x128xf32>
      %41 = arith.addf %13, %40 : vector<8x128xf32>
      %c1_i32_14 = arith.constant 1 : i32
      %c0_15 = arith.constant 0 : index
      %c0_16 = arith.constant 0 : index
      %42 = vector.load %arg4[%c0_15, %c0_16] : memref<8x128xf32, #tpu.memory_space<vmem>>, vector<8x128xf32>
      %43 = arith.addf %42, %41 : vector<8x128xf32>
      %c0_17 = arith.constant 0 : index
      %c0_18 = arith.constant 0 : index
      %44 = vector.load %arg4[%c0_17, %c0_18] : memref<8x128xf32, #tpu.memory_space<vmem>>, vector<8x128xf32>
      tpu.vector_store %arg4[%c0_17, %c0_18], %43 {strides = array<i32>} : memref<8x128xf32, #tpu.memory_space<vmem>>, vector<8x128xf32>,
    } else {
    }
    %true = arith.constant true
    %10 = arith.xori %7, %true : i1
    %11 = arith.extui %10 : i1 to i32
    %c0_i32_4 = arith.constant 0 : i32
    %12 = arith.cmpi ne, %11, %c0_i32_4 : i32
    scf.if %12 {
      %c16_i32_5 = arith.constant 16 : i32
      %13 = arith.muli %4, %c16_i32_5 : i32
      %cst = arith.constant 0.000000e+00 : f32
      %14 = vector.broadcast %cst : f32 to vector<8x128xf32>
      %c0_i32_6 = arith.constant 0 : i32
      %c16_i32_7 = arith.constant 16 : i32
      %15 = arith.muli %c0_i32_6, %c16_i32_7 : i32
      %16 = tpu.assume_multiple %15, 16 : i32
      %17 = arith.index_cast %16 : i32 to index
      %c0 = arith.constant 0 : index
      %18 = vector.load %arg2[%17, %c0] : memref<16x128xf32, #tpu.memory_space<vmem>>, vector<16x128xf32>
      %19 = arith.index_cast %16 : i32 to index
      %c0_8 = arith.constant 0 : index
      %20 = vector.load %arg3[%19, %c0_8] : memref<16x128xf32, #tpu.memory_space<vmem>>, vector<16x128xf32>
      %21 = arith.addi %13, %16 : i32
      %22 = tpu.iota {dimensions = array<i32: 0>} : vector<16x128xi32>
      %23 = vector.broadcast %21 : i32 to vector<16x128xi32>
      %24 = arith.addi %23, %22 : vector<16x128xi32>
      %c16_i32_9 = arith.constant 16 : i32
      %25 = vector.broadcast %c16_i32_9 : i32 to vector<16x128xi32>
      %26 = arith.cmpi slt, %24, %25 : vector<16x128xi32>
      %cst_10 = arith.constant 0.000000e+00 : f32
      %27 = vector.broadcast %cst_10 : f32 to vector<16x128xf32>
      %28 = arith.select %26, %18, %27 : vector<16x128xi1>, vector<16x128xf32>
      %cst_11 = arith.constant 0.000000e+00 : f32
      %29 = vector.broadcast %cst_11 : f32 to vector<16x128xf32>
      %30 = arith.select %26, %20, %29 : vector<16x128xi1>, vector<16x128xf32>
      %cst_12 = arith.constant 0.000000e+00 : f32
      %31 = vector.broadcast %cst_12 : f32 to vector<16x128xf32>
      %32 = arith.maximumf %28, %31 : vector<16x128xf32>
      %33 = arith.mulf %28, %30 : vector<16x128xf32>
      %34 = arith.subf %32, %33 : vector<16x128xf32>
      %35 = math.absf %28 : vector<16x128xf32>
      %cst_13 = arith.constant 0.000000e+00 : f32
      %36 = vector.broadcast %cst_13 : f32 to vector<16x128xf32>
      %37 = arith.subf %36, %35 : vector<16x128xf32>
      %38 = math.exp %37 : vector<16x128xf32>
      %39 = math.log1p %38 : vector<16x128xf32>
      %40 = arith.addf %34, %39 : vector<16x128xf32>
      %cst_14 = arith.constant 0.000000e+00 : f32
      %41 = vector.broadcast %cst_14 : f32 to vector<16x128xf32>
      %42 = arith.subf %41, %40 : vector<16x128xf32>
      %43 = math.exp %42 : vector<16x128xf32>
      %cst_15 = arith.constant 1.000000e+00 : f32
      %44 = vector.broadcast %cst_15 : f32 to vector<16x128xf32>
      %45 = arith.subf %44, %43 : vector<16x128xf32>
      %46 = arith.mulf %45, %45 : vector<16x128xf32>
      %cst_16 = arith.constant 2.500000e-01 : f32
      %47 = vector.broadcast %cst_16 : f32 to vector<16x128xf32>
      %48 = arith.mulf %47, %46 : vector<16x128xf32>
      %49 = arith.mulf %48, %40 : vector<16x128xf32>
      %cst_17 = arith.constant 0.000000e+00 : f32
      %50 = vector.broadcast %cst_17 : f32 to vector<16x128xf32>
      %51 = arith.select %26, %49, %50 : vector<16x128xi1>, vector<16x128xf32>
      %52 = vector.shape_cast %51 : vector<16x128xf32> to vector<2x8x128xf32>
      %cst_18 = arith.constant dense<0.000000e+00> : vector<8x128xf32>
      %53 = vector.multi_reduction <add>, %52, %cst_18 [0] : vector<2x8x128xf32> to vector<8x128xf32>
      %54 = arith.addf %14, %53 : vector<8x128xf32>
      %c1_i32_19 = arith.constant 1 : i32
      %c0_20 = arith.constant 0 : index
      %c0_21 = arith.constant 0 : index
      %55 = vector.load %arg4[%c0_20, %c0_21] : memref<8x128xf32, #tpu.memory_space<vmem>>, vector<8x128xf32>
      %56 = arith.addf %55, %54 : vector<8x128xf32>
      %c0_22 = arith.constant 0 : index
      %c0_23 = arith.constant 0 : index
      %57 = vector.load %arg4[%c0_22, %c0_23] : memref<8x128xf32, #tpu.memory_space<vmem>>, vector<8x128xf32>
      tpu.vector_store %arg4[%c0_22, %c0_23], %56 {strides = array<i32>} : memref<8x128xf32, #tpu.memory_space<vmem>>, vector<8x128xf32>,
    } else {
    }
    return
  }
  func.func @transform_0(%arg0: i32, %arg1: i32) -> (i32, i32) {
    %c1_i32 = arith.constant 1 : i32
    %0 = arith.muli %arg0, %c1_i32 : i32
    %1 = arith.addi %0, %arg1 : i32
    %c0_i32 = arith.constant 0 : i32
    %2 = arith.minsi %1, %c0_i32 : i32
    %c0_i32_0 = arith.constant 0 : i32
    %c0_i32_1 = arith.constant 0 : i32
    return %2, %c0_i32_0 : i32, i32
  }
  func.func @transform_1(%arg0: i32, %arg1: i32) -> (i32, i32) {
    %c1_i32 = arith.constant 1 : i32
    %0 = arith.muli %arg0, %c1_i32 : i32
    %1 = arith.addi %0, %arg1 : i32
    %c0_i32 = arith.constant 0 : i32
    %2 = arith.minsi %1, %c0_i32 : i32
    %c0_i32_0 = arith.constant 0 : i32
    %c0_i32_1 = arith.constant 0 : i32
    return %2, %c0_i32_0 : i32, i32
  }
  func.func @transform_2(%arg0: i32, %arg1: i32) -> (i32, i32) {
    %c0_i32 = arith.constant 0 : i32
    %c0_i32_0 = arith.constant 0 : i32
    return %arg0, %c0_i32 : i32, i32
  }
}

</mosaic_0001>

<llo_original>
// kernel: tpu_custom_call.1
$region0: #{tpu_custom_call.1}
  #allocation0 [shape = 'u32[]', space=smem, size = 0x4, offset = 0x4, fixed_abs, tag = 'smem constant byte address 0x4 - core index']
  #allocation1 [shape = 'u32[144,128]{1,0:T(1,128)}', space=vmem, size = 0x12000, scoped, tag = 'internal scratch']
  %s0 = inlined_call_operand.hbm [shape: f32[16,128], index: 0, kind: input, shape index: {}]
  %s1 = inlined_call_operand.hbm [shape: f32[16,128], index: 1, kind: input, shape index: {}]
  %s2 = inlined_call_operand.hbm [shape: f32[8,128], index: 2, kind: output, shape index: {}]
  %s3 = sld [smem:[#allocation0]]
  $region38: #{tpu_custom_call.1} parent=0
    _
  %s5 = ssub.s32 1, %s3
  %s6 = scalar_select 0, %s5, %s3
  $region1: #{tpu_custom_call.1} parent=0
    #allocation2 [shape = 'u8[8192]{0}', space=vmem, size = 0x2000, scoped, tag = 'input window, operand 0, single buffered']
    #allocation3 [shape = 's32[1]{0}', space=sflag, size = 0x4, scoped, tag = 'scoped memory for tpu_custom_call.1']
    #allocation4 [shape = 's32[1]{0}', space=sflag, size = 0x4, scoped, tag = 'scoped memory for tpu_custom_call.1']
    #allocation5 [shape = 'u8[8192]{0}', space=vmem, size = 0x2000, scoped, tag = 'input window, operand 1, single buffered']
    #allocation6 [shape = 's32[1]{0}', space=sflag, size = 0x4, scoped, tag = 'scoped memory for tpu_custom_call.1']
    #allocation7 [shape = 'u8[4096]{0}', space=vmem, size = 0x1000, scoped, tag = 'output window, operand 0, single buffered']
    %7 = vsyncpa [#allocation3], 0
    %8 = vsyncpa [#allocation6], 0
    %9 = vsyncpa [#allocation4], 0
    // Predicated region
    $region2: #{tpu_custom_call.1} parent=1 // pred_check
      _
    $region3: #{tpu_custom_call.1} parent=1 // pred_check_branch
      %11 = sbr.rel (0) target = $region5
    $region4: #{tpu_custom_call.1} parent=1 // pred_region
      %s12 = sadd.s32 0, 0
      %p13 = scmp.lt.s32.totalorder %s12, 0
      %s14 = scalar_select %p13, %s12, 0
      %s15 = smul.u32 2, %s14
      %s17 = ssub.s32 256, 256
      %18 = vsyncadd [#allocation3], %s17
      %s19 = smul.addr %s15, 128
      %s20 = scalar_lea.hbm %s0, %s19
      %s21 = sshll.u32 [#allocation2], 4
      %s22 = int_to_ptr.vmem [resolvable:$true] %s21
      %27 = dma.hbm_to_vmem [thread:$0]  %s20, 256, %s22, [#allocation3], 128, 128, 8
    $region5: #{tpu_custom_call.1} parent=1 // pred_fallthru
      _
    // Predicated region
    $region6: #{tpu_custom_call.1} parent=1 // pred_check
      _
    $region7: #{tpu_custom_call.1} parent=1 // pred_check_branch
      %29 = sbr.rel (0) target = $region9
    $region8: #{tpu_custom_call.1} parent=1 // pred_region
      %s30 = sadd.s32 0, 0
      %p31 = scmp.lt.s32.totalorder %s30, 0
      %s32 = scalar_select %p31, %s30, 0
      %s33 = smul.u32 2, %s32
      %s35 = ssub.s32 256, 256
      %36 = vsyncadd [#allocation6], %s35
      %s37 = smul.addr %s33, 128
      %s38 = scalar_lea.hbm %s1, %s37
      %s39 = sshll.u32 [#allocation5], 4
      %s40 = int_to_ptr.vmem [resolvable:$true] %s39
      %45 = dma.hbm_to_vmem [thread:$0]  %s38, 256, %s40, [#allocation6], 128, 128, 8
    $region9: #{tpu_custom_call.1} parent=1 // pred_fallthru
      _
    // Predicated region
    $region10: #{tpu_custom_call.1} parent=1 // pred_check
      _
    $region11: #{tpu_custom_call.1} parent=1 // pred_check_branch
      %47 = sbr.rel (0) target = $region13
    $region12: #{tpu_custom_call.1} parent=1 // pred_region
      %48 = dma.done [#allocation3], 256
    $region13: #{tpu_custom_call.1} parent=1 // pred_fallthru
      _
    // Predicated region
    $region14: #{tpu_custom_call.1} parent=1 // pred_check
      _
    $region15: #{tpu_custom_call.1} parent=1 // pred_check_branch
      %50 = sbr.rel (0) target = $region17
    $region16: #{tpu_custom_call.1} parent=1 // pred_region
      %51 = dma.done [#allocation6], 256
    $region17: #{tpu_custom_call.1} parent=1 // pred_fallthru
      _
    %s52 = sadd.s32 0, 0
    %p53 = scmp.lt.s32.totalorder %s52, 0
    %s54 = scalar_select %p53, %s52, 0
    %s55 = smul.u32 2, %s54
    %s56 = sadd.s32 0, 0
    %p57 = scmp.lt.s32.totalorder %s56, 0
    %s58 = scalar_select %p57, %s56, 0
    %s59 = smul.u32 2, %s58
    %p60 = scmp.eq.s32.totalorder 0, 0
    // Predicated region
    $region18: #{tpu_custom_call.1} parent=1 // pred_check
      %p61 = pneg %p60
    $region19: #{tpu_custom_call.1} parent=1 // pred_check_branch
      %63 = sbr.rel (%p61) target = $region21
    $region20: #{tpu_custom_call.1} parent=1 // pred_region
      %64 = vst [vmem:[#allocation7] sm:$0xff] 0.0
    $region21: #{tpu_custom_call.1} parent=1 // pred_fallthru
      _
    %s65 = sadd.s32 0, 0
    %s66 = sadd.s32 %s65, 1
    %s67 = smul.u32 %s66, 16
    %p68 = scmp.le.s32.totalorder %s67, 16
    // Predicated region
    $region22: #{tpu_custom_call.1} parent=1 // pred_check
      %p69 = pneg %p68
    $region23: #{tpu_custom_call.1} parent=1 // pred_check_branch
      %71 = sbr.rel (%p69) target = $region25
    $region24: #{tpu_custom_call.1} parent=1 // pred_region
      %v72 = vld [vmem:[#allocation2] sm:$0xff]
      %v73 = vld [vmem:[#allocation2 + $0x8] sm:$0xff]
      %v74 = vld [vmem:[#allocation5] sm:$0xff]
      %v75 = vld [vmem:[#allocation5 + $0x8] sm:$0xff]
      %v76 = vmax.f32 %v72, 0.0
      %v77 = vmax.f32 %v73, 0.0
      %v78 = vmul.f32 %v72, %v74
      %v79 = vmul.f32 %v73, %v75
      %v80 = vsub.f32 %v76, %v78
      %v81 = vsub.f32 %v77, %v79
      %v82 = vand.u32 2147483647, %v72
      %v83 = vand.u32 2147483647, %v73
      %v84 = vsub.f32 0.0, %v82
      %v85 = vsub.f32 0.0, %v83
      %v86 = vmul.f32 %v84, 1.442695
      %v87 = vpow.pop %v86
      %v88 = vmul.f32 %v85, 1.442695
      %v89 = vpow.pop %v88
      %v90 = vadd.f32 %v87, 1.0
      %v91 = vlog2.pop %v90
      %v92 = vmul.f32 %v91, 0.6931472
      %v93 = vmul.f32 -0.5, %v87
      %v94 = vadd.f32 %v93, 1.0
      %v95 = vmul.f32 %v94, %v87
      %v96 = vand.u32 2147483647, %v87
      %vm97 = vcmp.lt.f32.partialorder %v96, 0.0004427343
      %v98 = vsel %vm97, %v95, %v92
      %v99 = vadd.f32 %v89, 1.0
      %v100 = vlog2.pop %v99
      %v101 = vmul.f32 %v100, 0.6931472
      %v102 = vmul.f32 -0.5, %v89
      %v103 = vadd.f32 %v102, 1.0
      %v104 = vmul.f32 %v103, %v89
      %v105 = vand.u32 2147483647, %v89
      %vm106 = vcmp.lt.f32.partialorder %v105, 0.0004427343
      %v107 = vsel %vm106, %v104, %v101
      %v108 = vadd.f32 %v80, %v98
      %v109 = vadd.f32 %v81, %v107
      %v110 = vsub.f32 0.0, %v108
      %v111 = vsub.f32 0.0, %v109
      %v112 = vmul.f32 %v110, 1.442695
      %v113 = vpow.pop %v112
      %v114 = vmul.f32 %v111, 1.442695
      %v115 = vpow.pop %v114
      %v116 = vsub.f32 1.0, %v113
      %v117 = vsub.f32 1.0, %v115
      %v118 = vmul.f32 %v116, %v116
      %v119 = vmul.f32 %v117, %v117
      %v120 = vmul.f32 %v118, 0.25
      %v121 = vmul.f32 %v119, 0.25
      %v122 = vmul.f32 %v120, %v108
      %v123 = vmul.f32 %v121, %v109
      %v124 = vadd.f32 %v122, %v123
      %v125 = vadd.f32 %v124, 0.0
      %v126 = vld [vmem:[#allocation7] sm:$0xff]
      %v127 = vadd.f32 %v126, %v125
      %128 = vst [vmem:[#allocation7] sm:$0xff] %v127
    $region25: #{tpu_custom_call.1} parent=1 // pred_fallthru
      _
    %p129 = scmp.gt.s32.totalorder %s67, 16
    // Predicated region
    $region26: #{tpu_custom_call.1} parent=1 // pred_check
      %p130 = pneg %p129
    $region27: #{tpu_custom_call.1} parent=1 // pred_check_branch
      %132 = sbr.rel (%p130) target = $region29
    $region28: #{tpu_custom_call.1} parent=1 // pred_region
      %s133 = smul.u32 %s65, 16
      %v134 = vld [vmem:[#allocation2] sm:$0xff]
      %v135 = vld [vmem:[#allocation2 + $0x8] sm:$0xff]
      %v136 = vld [vmem:[#allocation5] sm:$0xff]
      %v137 = vld [vmem:[#allocation5 + $0x8] sm:$0xff]
      %s138 = sadd.s32 %s133, 0
      %v139 = vlaneseq
      %v140 = vshrl.u32 %v139, 7
      %v141 = vadd.s32 %v140, 8
      %v142 = vstv %s138
      %v143 = vadd.s32 %v142, %v140
      %v144 = vadd.s32 %v142, %v141
      %vm145 = vcmp.lt.s32.totalorder %v143, 16
      %vm146 = vcmp.lt.s32.totalorder %v144, 16
      %v147 = vsel %vm145, %v134, 0.0
      %v148 = vsel %vm146, %v135, 0.0
      %v149 = vsel %vm145, %v136, 0.0
      %v150 = vsel %vm146, %v137, 0.0
      %v151 = vmax.f32 %v147, 0.0
      %v152 = vmax.f32 %v148, 0.0
      %v153 = vmul.f32 %v147, %v149
      %v154 = vmul.f32 %v148, %v150
      %v155 = vsub.f32 %v151, %v153
      %v156 = vsub.f32 %v152, %v154
      %v157 = vand.u32 2147483647, %v147
      %v158 = vand.u32 2147483647, %v148
      %v159 = vsub.f32 0.0, %v157
      %v160 = vsub.f32 0.0, %v158
      %v161 = vmul.f32 %v159, 1.442695
      %v162 = vpow.pop %v161
      %v163 = vmul.f32 %v160, 1.442695
      %v164 = vpow.pop %v163
      %v165 = vadd.f32 %v162, 1.0
      %v166 = vlog2.pop %v165
      %v167 = vmul.f32 %v166, 0.6931472
      %v168 = vmul.f32 -0.5, %v162
      %v169 = vadd.f32 %v168, 1.0
      %v170 = vmul.f32 %v169, %v162
      %v171 = vand.u32 2147483647, %v162
      %vm172 = vcmp.lt.f32.partialorder %v171, 0.0004427343
      %v173 = vsel %vm172, %v170, %v167
      %v174 = vadd.f32 %v164, 1.0
      %v175 = vlog2.pop %v174
      %v176 = vmul.f32 %v175, 0.6931472
      %v177 = vmul.f32 -0.5, %v164
      %v178 = vadd.f32 %v177, 1.0
      %v179 = vmul.f32 %v178, %v164
      %v180 = vand.u32 2147483647, %v164
      %vm181 = vcmp.lt.f32.partialorder %v180, 0.0004427343
      %v182 = vsel %vm181, %v179, %v176
      %v183 = vadd.f32 %v155, %v173
      %v184 = vadd.f32 %v156, %v182
      %v185 = vsub.f32 0.0, %v183
      %v186 = vsub.f32 0.0, %v184
      %v187 = vmul.f32 %v185, 1.442695
      %v188 = vpow.pop %v187
      %v189 = vmul.f32 %v186, 1.442695
      %v190 = vpow.pop %v189
      %v191 = vsub.f32 1.0, %v188
      %v192 = vsub.f32 1.0, %v190
      %v193 = vmul.f32 %v191, %v191
      %v194 = vmul.f32 %v192, %v192
      %v195 = vmul.f32 %v193, 0.25
      %v196 = vmul.f32 %v194, 0.25
      %v197 = vmul.f32 %v195, %v183
      %v198 = vmul.f32 %v196, %v184
      %v199 = vsel %vm145, %v197, 0.0
      %v200 = vsel %vm146, %v198, 0.0
      %v201 = vadd.f32 %v199, %v200
      %v202 = vadd.f32 %v201, 0.0
      %v203 = vld [vmem:[#allocation7] sm:$0xff]
      %v204 = vadd.f32 %v203, %v202
      %205 = vst [vmem:[#allocation7] sm:$0xff] %v204
    $region29: #{tpu_custom_call.1} parent=1 // pred_fallthru
      _
    // Predicated region
    $region30: #{tpu_custom_call.1} parent=1 // pred_check
      _
    $region31: #{tpu_custom_call.1} parent=1 // pred_check_branch
      %207 = sbr.rel (0) target = $region33
    $region32: #{tpu_custom_call.1} parent=1 // pred_region
      %s209 = ssub.s32 128, 128
      %210 = vsyncadd [#allocation4], %s209
      %s212 = sshll.u32 [#allocation7], 4
      %s213 = int_to_ptr.vmem [resolvable:$true] %s212
      %215 = dma.vmem_to_hbm [thread:$0]  %s213, 128, %s2, [#allocation4]
    $region33: #{tpu_custom_call.1} parent=1 // pred_fallthru
      _
    // Predicated region
    $region34: #{tpu_custom_call.1} parent=1 // pred_check
      _
    $region35: #{tpu_custom_call.1} parent=1 // pred_check_branch
      %217 = sbr.rel (0) target = $region37
    $region36: #{tpu_custom_call.1} parent=1 // pred_region
      %218 = dma.done [#allocation4], 128
    $region37: #{tpu_custom_call.1} parent=1 // pred_fallthru
      _
    %219 = vsyncpa [#allocation3], 1
    %220 = vsyncpa [#allocation6], 1
    %221 = vsyncpa [#allocation4], 1

</llo_original>
